<compile_context>
chip_gen: v7x
topology: tpu7x:2x2x1
jax: 0.10.0
libtpu: 0.0.40
codegen_flags: <defaults>
</compile_context>

<pallas_src>
import math

import jax
import jax.numpy as jnp
from jax.experimental import pallas as pl
from jax.experimental.pallas import tpu as pltpu


_TINY_BYTES = 1 << 20  # below this, use jnp.concatenate (fixed cost dominates)


def _sublane_multiple(itemsize):
    # Native sublane tile height: 8 for 4-byte, 16 for 2-byte, 32 for 1-byte.
    return max(8, 32 // max(1, itemsize))


def _vmem_budget():
    """Return (double-buffered working-set budget, scoped vmem limit) in bytes."""
    cap = None
    try:
        cap = getattr(pltpu.get_tpu_info(), "vmem_capacity_bytes", None)
    except Exception:
        cap = None
    if not cap:
        cap = 64 * 1024 * 1024  # conservative fallback: v7x per-TC VMEM
    limit = int(cap) * 3 // 4       # scoped VMEM limit we request from Mosaic
    budget = limit * 3 // 4         # working-set budget (pipeline headroom)
    return budget, limit


def _choose_tile_pre(pre, per_row_bytes, sublane, budget_bytes):
    """Largest sublane-aligned row tile whose double-buffered set fits the budget."""
    if pre <= sublane:
        return pre
    tile = budget_bytes // max(1, 2 * per_row_bytes)   # x2: double buffering
    tile = max(sublane, (tile // sublane) * sublane)
    return min(tile, pre)


def _balance_grid(pre, tile_pre, sublane):
    """If the row grid is short and odd, rebalance to an even length so the two
    v7x TensorCores split the work evenly (also removes the partial last tile)."""
    n = -(-pre // tile_pre)
    if n <= 1 or n >= 8 or n % 2 == 0:
        return tile_pre
    new_tile = -(-pre // (n + 1))
    new_tile = -(-new_tile // sublane) * sublane
    return max(sublane, min(new_tile, tile_pre))


def _concat_dma(xs_2d, widths, pre, total_width, out_dtype):
    """Pure data-movement path: one strided HBM->HBM DMA per input."""
    n_in = len(xs_2d)
    in_bytes = sum(int(x.size) * jnp.dtype(x.dtype).itemsize for x in xs_2d)
    out_bytes = pre * total_width * jnp.dtype(out_dtype).itemsize

    def kernel(*refs):
        sem = refs[-1]
        out_ref = refs[-2]
        in_refs = refs[:-2]
        copies = []
        off = 0
        for n, (in_ref, w) in enumerate(zip(in_refs, widths)):
            cp = pltpu.make_async_copy(in_ref, out_ref.at[:, off:off + w], sem.at[n])
            cp.start()
            copies.append(cp)
            off += w
        for cp in copies:
            cp.wait()

    return pl.pallas_call(
        kernel,
        out_shape=jax.ShapeDtypeStruct((pre, total_width), out_dtype),
        in_specs=[pl.BlockSpec(memory_space=pl.ANY) for _ in xs_2d],
        out_specs=pl.BlockSpec(memory_space=pl.ANY),
        scratch_shapes=[pltpu.SemaphoreType.DMA((n_in,))],
        compiler_params=pltpu.CompilerParams(has_side_effects=True),
        cost_estimate=pl.CostEstimate(
            flops=0, transcendentals=0, bytes_accessed=in_bytes + out_bytes),
    )(*xs_2d)


def _concat_tiled(xs_2d, widths, pre, total_width, out_dtype, sublane):
    """Row-tiled VMEM path (handles dtype cast and non-lane-aligned columns)."""
    itemsizes = [jnp.dtype(x.dtype).itemsize for x in xs_2d]
    out_itemsize = jnp.dtype(out_dtype).itemsize
    per_row_bytes = (sum(w * i for w, i in zip(widths, itemsizes))
                     + total_width * out_itemsize)
    budget, limit = _vmem_budget()
    tile_pre = _choose_tile_pre(pre, per_row_bytes, sublane, budget)
    tile_pre = _balance_grid(pre, tile_pre, sublane)
    grid = (pl.cdiv(pre, tile_pre),)

    def kernel(*refs):
        out_ref = refs[-1]
        in_refs = refs[:-1]
        off = 0
        for in_ref, w in zip(in_refs, widths):
            # Cast at the store: the VPU cast rides in otherwise-idle VALU
            # slots of this memory-bound copy kernel.
            out_ref[:, off:off + w] = in_ref[...].astype(out_ref.dtype)
            off += w

    in_bytes = sum(pre * w * i for w, i in zip(widths, itemsizes))
    out_bytes = pre * total_width * out_itemsize

    return pl.pallas_call(
        kernel,
        out_shape=jax.ShapeDtypeStruct((pre, total_width), out_dtype),
        grid=grid,
        in_specs=[
            pl.BlockSpec((tile_pre, w), lambda i: (i, 0), memory_space=pltpu.VMEM)
            for w in widths
        ],
        out_specs=pl.BlockSpec(
            (tile_pre, total_width), lambda i: (i, 0), memory_space=pltpu.VMEM),
        compiler_params=pltpu.CompilerParams(
            dimension_semantics=("parallel",),
            vmem_limit_bytes=limit,
        ),
        cost_estimate=pl.CostEstimate(
            flops=0, transcendentals=0, bytes_accessed=in_bytes + out_bytes),
    )(*xs_2d)


def concatenate(xs, dim, *, force_pallas=False):
    """Pallas implementation of torch.cat(xs, dim=dim)."""
    assert len(xs) >= 1
    ndim = xs[0].ndim
    if dim < 0:
        dim += ndim

    shapes = [x.shape for x in xs]
    # All dims except `dim` must match (same contract as torch.cat).
    for s in shapes[1:]:
        assert len(s) == ndim
        for a in range(ndim):
            if a != dim:
                assert s[a] == shapes[0][a]

    out_dtype = jnp.result_type(*[x.dtype for x in xs])
    out_itemsize = jnp.dtype(out_dtype).itemsize
    pre = math.prod(shapes[0][:dim]) if dim > 0 else 1
    post = math.prod(shapes[0][dim + 1:]) if dim + 1 < ndim else 1
    c_sizes = [s[dim] for s in shapes]
    c_total = sum(c_sizes)

    out_shape = list(shapes[0])
    out_shape[dim] = c_total
    out_shape = tuple(out_shape)
    total_width = c_total * post

    # Degenerate cases: nothing to copy.
    if pre == 0 or total_width == 0:
        return jnp.zeros(out_shape, out_dtype)

    total_bytes = (sum(int(x.size) * jnp.dtype(x.dtype).itemsize for x in xs)
                   + pre * total_width * out_itemsize)
    if not force_pallas and total_bytes < _TINY_BYTES:
        # pallas_call fixed cost dominates; let XLA fuse the tiny concat.
        return jnp.concatenate(xs, axis=dim).astype(out_dtype)

    # Drop zero-width inputs (allowed by torch.cat; empty slices don't lower).
    kept = [(x, c * post) for x, c in zip(xs, c_sizes) if c * post > 0]
    xs_kept = [x for x, _ in kept]
    widths = [w for _, w in kept]

    # 2-D slab views.
    xs_2d = [x.reshape(pre, w) for x, w in zip(xs_kept, widths)]

    needs_cast = any(x.dtype != out_dtype for x in xs_kept)
    lane_aligned = all(w % 128 == 0 for w in widths)  # => all offsets aligned too
    sublane = max([_sublane_multiple(jnp.dtype(x.dtype).itemsize) for x in xs_kept]
                  + [_sublane_multiple(out_itemsize)])

    if lane_aligned and not needs_cast:
        # Pure data movement: strided HBM->HBM DMAs, no VMEM bounce.
        out_2d = _concat_dma(xs_2d, widths, pre, total_width, out_dtype)
    elif lane_aligned and needs_cast and pre < sublane:
        # Tiny PRE wastes 7/8+ of every vreg sublane in a tiled copy; cast in
        # the wrapper (one fused XLA pass) and use the pure-DMA path instead.
        xs_2d = [x.astype(out_dtype) for x in xs_2d]
        out_2d = _concat_dma(xs_2d, widths, pre, total_width, out_dtype)
    else:
        # Cast needed and/or non-128-aligned column ranges: tiled VMEM copy.
        out_2d = _concat_tiled(xs_2d, widths, pre, total_width, out_dtype, sublane)

    return out_2d.reshape(out_shape)


class Concatenate:
    """Mirror of keras4torch's Concatenate(nn.Module) forward pass."""

    def __init__(self, dim):
        self.dim = dim

    def __call__(self, x, force_pallas=False):
        return concatenate(list(x), self.dim, force_pallas=force_pallas)


def _check(xs, dim, force_pallas=True):
    out = jax.block_until_ready(concatenate(xs, dim=dim, force_pallas=force_pallas))
    ref = jnp.concatenate(xs, axis=dim)
    assert out.shape == ref.shape, (out.shape, ref.shape)
    assert out.dtype == ref.dtype, (out.dtype, ref.dtype)
    assert bool(jnp.array_equal(out, ref)), ("mismatch", dim)


if __name__ == "__main__":
    key = jax.random.PRNGKey(0)
    k1, k2, k3, k4, k5, k6, k7 = jax.random.split(key, 7)

    # 1) Small NCHW channel concat (dim=1), same dtype, lane-aligned columns
    #    -> HBM->HBM DMA path (forced past the tiny-concat fallback).
    x1 = jax.random.normal(k1, (2, 4, 16, 16), dtype=jnp.float32)
    x2 = jax.random.normal(k2, (2, 6, 16, 16), dtype=jnp.float32)
    x3 = jax.random.normal(k3, (2, 2, 16, 16), dtype=jnp.float32)
    _check([x1, x2, x3], dim=1)

    # 2) Mixed dtype with tiny PRE -> wrapper cast + DMA path.
    x4 = jax.random.normal(k4, (2, 6, 16, 16), dtype=jnp.bfloat16)
    _check([x1, x4], dim=1)

    # 3) Mixed dtype with a real row extent -> tiled VMEM path, cast in-kernel.
    z1 = jax.random.normal(k5, (256, 4, 16, 16), dtype=jnp.float32)
    z2 = jax.random.normal(k6, (256, 6, 16, 16), dtype=jnp.bfloat16)
    _check([z1, z2], dim=1)

    # 4) Concat along the last dim with non-128-aligned widths -> tiled VMEM
    #    path (masked column stores), same dtype.
    w1 = jax.random.normal(k7, (4, 8, 16, 32), dtype=jnp.float32)
    w2 = jax.random.normal(k1, (4, 8, 16, 96), dtype=jnp.float32)
    _check([w1, w2], dim=-1)

    # 5) Larger batch, same dtype, lane-aligned -> DMA path via default routing
    #    (no force), exercising large strided DMAs plus tiles/partial handling.
    y1 = jax.random.normal(k2, (512, 3, 16, 16), dtype=jnp.float32)
    y2 = jax.random.normal(k3, (512, 5, 16, 16), dtype=jnp.float32)
    _check([y1, y2], dim=1, force_pallas=False)

    # 6) Tiny-concat fallback and the layer-style wrapper.
    layer = Concatenate(dim=1)
    out = jax.block_until_ready(layer([x1, x2]))
    assert out.shape == (2, 10, 16, 16)

    print("KERNEL_OK")
</pallas_src>

<mosaic_0001>
module attributes {stable_mosaic.version = 11 : i64} {
  func.func @kernel(%arg0: memref<2x1024xf32, #tpu.memory_space<any>>, %arg1: memref<2x1536xf32, #tpu.memory_space<any>>, %arg2: memref<2x512xf32, #tpu.memory_space<any>>, %arg3: memref<2x3072xf32, #tpu.memory_space<any>>, %arg4: memref<3x!tpu.dma_semaphore, #tpu.memory_space<semaphore_mem>>) attributes {dimension_semantics = [], scalar_prefetch = 0 : i64, scratch_operands = 1 : i64, tpu.core_type = #tpu.core_type<tc>} {
    %c0_i32 = arith.constant 0 : i32
    %c0_i32_0 = arith.constant 0 : i32
    %c0_i32_1 = arith.constant 0 : i32
    %0 = tpu.memref_slice %arg3[%c0_i32_0, %c0_i32_1] : memref<2x3072xf32, #tpu.memory_space<any>> -> memref<2x1024xf32, #tpu.memory_space<any>>
    %1 = tpu.memref_slice %arg4[%c0_i32] : memref<3x!tpu.dma_semaphore, #tpu.memory_space<semaphore_mem>> -> memref<1x!tpu.dma_semaphore, #tpu.memory_space<semaphore_mem>>
    %2 = tpu.memref_squeeze %1 : memref<1x!tpu.dma_semaphore, #tpu.memory_space<semaphore_mem>> -> memref<!tpu.dma_semaphore, #tpu.memory_space<semaphore_mem>>
    tpu.enqueue_dma source(%arg0 : memref<2x1024xf32, #tpu.memory_space<any>>) target(%0 : memref<2x1024xf32, #tpu.memory_space<any>>) target_semaphore(%2 : memref<!tpu.dma_semaphore, #tpu.memory_space<semaphore_mem>>)
    %c1_i32 = arith.constant 1 : i32
    %c0_i32_2 = arith.constant 0 : i32
    %c1024_i32 = arith.constant 1024 : i32
    %3 = tpu.memref_slice %arg3[%c0_i32_2, %c1024_i32] : memref<2x3072xf32, #tpu.memory_space<any>> -> memref<2x1536xf32, #tpu.memory_space<any>>
    %4 = tpu.memref_slice %arg4[%c1_i32] : memref<3x!tpu.dma_semaphore, #tpu.memory_space<semaphore_mem>> -> memref<1x!tpu.dma_semaphore, #tpu.memory_space<semaphore_mem>>
    %5 = tpu.memref_squeeze %4 : memref<1x!tpu.dma_semaphore, #tpu.memory_space<semaphore_mem>> -> memref<!tpu.dma_semaphore, #tpu.memory_space<semaphore_mem>>
    tpu.enqueue_dma source(%arg1 : memref<2x1536xf32, #tpu.memory_space<any>>) target(%3 : memref<2x1536xf32, #tpu.memory_space<any>>) target_semaphore(%5 : memref<!tpu.dma_semaphore, #tpu.memory_space<semaphore_mem>>)
    %c2_i32 = arith.constant 2 : i32
    %c0_i32_3 = arith.constant 0 : i32
    %c2560_i32 = arith.constant 2560 : i32
    %6 = tpu.memref_slice %arg3[%c0_i32_3, %c2560_i32] : memref<2x3072xf32, #tpu.memory_space<any>> -> memref<2x512xf32, #tpu.memory_space<any>>
    %7 = tpu.memref_slice %arg4[%c2_i32] : memref<3x!tpu.dma_semaphore, #tpu.memory_space<semaphore_mem>> -> memref<1x!tpu.dma_semaphore, #tpu.memory_space<semaphore_mem>>
    %8 = tpu.memref_squeeze %7 : memref<1x!tpu.dma_semaphore, #tpu.memory_space<semaphore_mem>> -> memref<!tpu.dma_semaphore, #tpu.memory_space<semaphore_mem>>
    tpu.enqueue_dma source(%arg2 : memref<2x512xf32, #tpu.memory_space<any>>) target(%6 : memref<2x512xf32, #tpu.memory_space<any>>) target_semaphore(%8 : memref<!tpu.dma_semaphore, #tpu.memory_space<semaphore_mem>>)
    %c0_i32_4 = arith.constant 0 : i32
    %c0_i32_5 = arith.constant 0 : i32
    %c0_i32_6 = arith.constant 0 : i32
    %9 = tpu.memref_slice %arg3[%c0_i32_5, %c0_i32_6] : memref<2x3072xf32, #tpu.memory_space<any>> -> memref<2x1024xf32, #tpu.memory_space<any>>
    %10 = tpu.memref_slice %arg4[%c0_i32_4] : memref<3x!tpu.dma_semaphore, #tpu.memory_space<semaphore_mem>> -> memref<1x!tpu.dma_semaphore, #tpu.memory_space<semaphore_mem>>
    %11 = tpu.memref_squeeze %10 : memref<1x!tpu.dma_semaphore, #tpu.memory_space<semaphore_mem>> -> memref<!tpu.dma_semaphore, #tpu.memory_space<semaphore_mem>>
    tpu.wait_dma2 semaphore(%11 : memref<!tpu.dma_semaphore, #tpu.memory_space<semaphore_mem>>) src(%arg0 : memref<2x1024xf32, #tpu.memory_space<any>>) dst(%9 : memref<2x1024xf32, #tpu.memory_space<any>>)
    %c1_i32_7 = arith.constant 1 : i32
    %c0_i32_8 = arith.constant 0 : i32
    %c1024_i32_9 = arith.constant 1024 : i32
    %12 = tpu.memref_slice %arg3[%c0_i32_8, %c1024_i32_9] : memref<2x3072xf32, #tpu.memory_space<any>> -> memref<2x1536xf32, #tpu.memory_space<any>>
    %13 = tpu.memref_slice %arg4[%c1_i32_7] : memref<3x!tpu.dma_semaphore, #tpu.memory_space<semaphore_mem>> -> memref<1x!tpu.dma_semaphore, #tpu.memory_space<semaphore_mem>>
    %14 = tpu.memref_squeeze %13 : memref<1x!tpu.dma_semaphore, #tpu.memory_space<semaphore_mem>> -> memref<!tpu.dma_semaphore, #tpu.memory_space<semaphore_mem>>
    tpu.wait_dma2 semaphore(%14 : memref<!tpu.dma_semaphore, #tpu.memory_space<semaphore_mem>>) src(%arg1 : memref<2x1536xf32, #tpu.memory_space<any>>) dst(%12 : memref<2x1536xf32, #tpu.memory_space<any>>)
    %c2_i32_10 = arith.constant 2 : i32
    %c0_i32_11 = arith.constant 0 : i32
    %c2560_i32_12 = arith.constant 2560 : i32
    %15 = tpu.memref_slice %arg3[%c0_i32_11, %c2560_i32_12] : memref<2x3072xf32, #tpu.memory_space<any>> -> memref<2x512xf32, #tpu.memory_space<any>>
    %16 = tpu.memref_slice %arg4[%c2_i32_10] : memref<3x!tpu.dma_semaphore, #tpu.memory_space<semaphore_mem>> -> memref<1x!tpu.dma_semaphore, #tpu.memory_space<semaphore_mem>>
    %17 = tpu.memref_squeeze %16 : memref<1x!tpu.dma_semaphore, #tpu.memory_space<semaphore_mem>> -> memref<!tpu.dma_semaphore, #tpu.memory_space<semaphore_mem>>
    tpu.wait_dma2 semaphore(%17 : memref<!tpu.dma_semaphore, #tpu.memory_space<semaphore_mem>>) src(%arg2 : memref<2x512xf32, #tpu.memory_space<any>>) dst(%15 : memref<2x512xf32, #tpu.memory_space<any>>)
    return
  }
}

</mosaic_0001>

<llo_original>
// kernel: tpu_custom_call.1
$region0: #{tpu_custom_call.1}
  #allocation0 [shape = 'u32[]', space=smem, size = 0x4, offset = 0x4, fixed_abs, tag = 'smem constant byte address 0x4 - core index']
  #allocation1 [shape = 'u32[144,128]{1,0:T(1,128)}', space=vmem, size = 0x12000, scoped, tag = 'internal scratch']
  #allocation2 [shape = 's32[3]{0}', space=sflag, size = 0xc, scoped, tag = 'scratch operand']
  #allocation3 [shape = 's32[]', space=sflag, size = 0x4, offset = 0, fixed_abs, tag = 'sflag constant byte address 0x0 - dummy sync flag']
  #allocation4 [shape = 'u32[0]{0}', space=smem, size = 0, offset = 0, fixed_abs, tag = 'smem constant byte address 0x0 - null']
  #allocation5 [shape = 's32[]', space=sflag, size = 0x4, offset = 0, fixed_abs, tag = 'sflag constant byte address 0x0 - dummy sync flag']
  #allocation6 [shape = 'u32[0]{0}', space=smem, size = 0, offset = 0, fixed_abs, tag = 'smem constant byte address 0x0 - null']
  #allocation7 [shape = 's32[]', space=sflag, size = 0x4, offset = 0, fixed_abs, tag = 'sflag constant byte address 0x0 - dummy sync flag']
  #allocation8 [shape = 'u32[0]{0}', space=smem, size = 0, offset = 0, fixed_abs, tag = 'smem constant byte address 0x0 - null']
  %s0 = inlined_call_operand.hbm [shape: f32[2,1024], index: 0, kind: input, shape index: {}]
  %s1 = inlined_call_operand.hbm [shape: f32[2,1536], index: 1, kind: input, shape index: {}]
  %s2 = inlined_call_operand.hbm [shape: f32[2,512], index: 2, kind: input, shape index: {}]
  %s3 = inlined_call_operand.hbm [shape: f32[2,3072], index: 3, kind: output, shape index: {}]
  %s4 = sld [smem:[#allocation0]]
  $region2: #{tpu_custom_call.1} parent=0
    _
  %s6 = ssub.s32 1, %s4
  %s7 = scalar_select 0, %s6, %s4
  %s9 = sshll.u32 1, 14
  %s10 = sxor.u32 4294967295, %s9
  %s13 = sshll.u32 3, 24
  %s14 = sxor.u32 4294967295, %s13
  %s15 = sand.u32 0, %s14
  %s17 = sor.u32 %s15, 0
  %20 = dma.general %s0, 256, %s3, [#allocation2], [#allocation3], [#allocation4], %s17, 0
  %s21 = scalar_lea.hbm %s3, 256
  %s22 = scalar_lea.sflag [#allocation2], 1
  %s24 = sshll.u32 1, 14
  %s25 = sxor.u32 4294967295, %s24
  %s28 = sshll.u32 3, 24
  %s29 = sxor.u32 4294967295, %s28
  %s30 = sand.u32 0, %s29
  %s32 = sor.u32 %s30, 0
  %35 = dma.general %s1, 384, %s21, %s22, [#allocation5], [#allocation6], %s32, 0
  %s36 = scalar_lea.hbm %s3, 640
  %s37 = scalar_lea.sflag [#allocation2], 2
  %s39 = sshll.u32 1, 14
  %s40 = sxor.u32 4294967295, %s39
  %s43 = sshll.u32 3, 24
  %s44 = sxor.u32 4294967295, %s43
  %s45 = sand.u32 0, %s44
  %s47 = sor.u32 %s45, 0
  %50 = dma.general %s2, 128, %s36, %s37, [#allocation7], [#allocation8], %s47, 0
  %s51 = smul.u32 2, 1
  %s52 = smul.u32 %s51, 8
  %s53 = sshll.u32 %s52, 4
  %54 = dma.done [#allocation2], %s53
  %s55 = smul.u32 %s51, 12
  %s56 = sshll.u32 %s55, 4
  %57 = dma.done %s22, %s56
  %s58 = smul.u32 %s51, 4
  %s59 = sshll.u32 %s58, 4
  %60 = dma.done %s37, %s59
  %61 = vsyncmov [#allocation2]
  %s62 = vpop.sfrf %61
  %p63 = scmp.eq.s32.totalorder %s62, 0
  %p64 = pneg %p63
  %66 = shalt.err (%p64)
  %s67 = scalar_lea.sflag [#allocation2], 1
  %68 = vsyncmov %s67
  %s69 = vpop.sfrf %68
  %p70 = scmp.eq.s32.totalorder %s69, 0
  %p71 = pneg %p70
  %73 = shalt.err (%p71)
  %s74 = scalar_lea.sflag [#allocation2], 2
  %75 = vsyncmov %s74
  %s76 = vpop.sfrf %75
  %p77 = scmp.eq.s32.totalorder %s76, 0
  %p78 = pneg %p77
  %80 = shalt.err (%p78)

</llo_original>
